<compile_context>
chip_gen: v5e
topology: v5e:2x2
jax: 0.10.0
libtpu: 0.0.40
codegen_flags: <defaults>
</compile_context>

<pallas_src>
import functools

import jax
import jax.numpy as jnp
from jax.experimental import pallas as pl
from jax.experimental.pallas import tpu as pltpu


def _midc_kernel(clear_ref, foggy_ref, out_ref, *, c, ts, s, ntps, needs_mask):
    p = pl.program_id(0)   # spatial split (small-batch megacore on v7x)
    t = pl.program_id(2)   # spatial tile within this split

    @pl.when(t == 0)
    def _init():
        out_ref[...] = jnp.zeros_like(out_ref)

    # Dark channel: streaming elementwise min over the (leading, non-minor)
    # channel axis in native dtype; cast only the (ts, 128) result to f32.
    cdc = clear_ref[0]
    fdc = foggy_ref[0]
    for ch in range(1, c):
        cdc = jnp.minimum(cdc, clear_ref[ch])
        fdc = jnp.minimum(fdc, foggy_ref[ch])
    cdc = cdc.astype(jnp.float32)
    fdc = fdc.astype(jnp.float32)

    diff = cdc - fdc                          # (ts, 128)
    l1 = jnp.maximum(diff, 0.0)               # == |m*DC_f - m*DC_c|
    m = (diff > 0.0).astype(jnp.float32)      # == (clear_dc > foggy_dc)

    def _accumulate(l1v, mv):
        if ts % 8 == 0:
            # Split sublane axis on vreg boundaries -> pure VPU adds.
            out_ref[0, :, :] += jnp.sum(l1v.reshape(ts // 8, 8, 128), axis=0)
            out_ref[1, :, :] += jnp.sum(mv.reshape(ts // 8, 8, 128), axis=0)
        else:
            # Tiny full-extent tile (ts == s not a multiple of 8): one-shot
            # cross-sublane reduce, negligible for such small inputs.
            out_ref[0, pl.ds(0, 1), :] += jnp.sum(l1v, axis=0, keepdims=True)
            out_ref[1, pl.ds(0, 1), :] += jnp.sum(mv, axis=0, keepdims=True)

    if needs_mask:
        nt_total = pl.num_programs(0) * ntps
        tg = p * ntps + t                     # global spatial tile index
        is_last = tg == nt_total - 1

        # Only the single ragged last tile pays for the OOB-sublane mask.
        @pl.when(is_last)
        def _masked():
            sub = jax.lax.broadcasted_iota(jnp.int32, (ts, 128), 0) + tg * ts
            valid = sub < s
            _accumulate(jnp.where(valid, l1, 0.0), jnp.where(valid, m, 0.0))

        @pl.when(jnp.logical_not(is_last))
        def _full():
            _accumulate(l1, m)
    else:
        _accumulate(l1, m)


def _vmem_budget():
    """(target bytes per input block, vmem_limit_bytes), generation-aware."""
    cap = None
    try:
        cap = getattr(pltpu.get_tpu_info(), "vmem_capacity_bytes", None)
    except Exception:
        cap = None
    if cap is not None and cap >= 100 * 1024 * 1024:
        # v5e / v6e: 128 MiB physical VMEM per TensorCore.
        return 8 * 1024 * 1024, 64 * 1024 * 1024
    # v7x (64 MiB per TC) or unknown: conservative budget, safe everywhere.
    return 4 * 1024 * 1024, 48 * 1024 * 1024


def _pick_tile_sublanes(c, s, itemsize, target_block_bytes):
    """Spatial tile size (in sublanes of 128 lanes) -> (ts, needs_mask).

    Prefers a ts that divides s exactly (no ragged tile / no mask) as long as
    that divisor is not pathologically small.
    """
    target = target_block_bytes // (c * 128 * itemsize)
    target = max(8, (target // 8) * 8)
    if target >= s:
        return s, False                      # single full-extent tile
    if s % 8 == 0:
        ts = target
        while ts >= 8:
            if s % ts == 0:
                if 2 * ts >= target:         # divisor big enough to stay efficient
                    return ts, False
                break
            ts -= 8
    return target, True                      # ragged last tile, masked in-kernel


def midc_loss(clear, foggy):
    """Pallas TPU implementation of MIDCLoss.forward.

    clear, foggy: arrays of shape (N, C, H, W) (float32 or bfloat16).
    Returns a scalar float32 (NaN/Inf if sum(mask) == 0, matching PyTorch).
    """
    assert clear.shape == foggy.shape
    n, c, h, w = clear.shape
    hw = h * w

    # Lane-dense layout: (N, C, H*W) viewed as (N, C, S, 128).  Only lane
    # density (hw % 128 == 0) forces a pad; padded zeros are inert (diff == 0).
    # TODO(synk): an in-kernel flattened-index lane mask on the last tile would
    # avoid this pad copy when hw % 128 != 0 (rare for real image shapes).
    pad = (-hw) % 128
    clear_l = clear.reshape(n, c, hw)
    foggy_l = foggy.reshape(n, c, hw)
    if pad:
        clear_l = jnp.pad(clear_l, ((0, 0), (0, 0), (0, pad)))
        foggy_l = jnp.pad(foggy_l, ((0, 0), (0, 0), (0, pad)))
    s = (hw + pad) // 128
    clear_l = clear_l.reshape(n, c, s, 128)
    foggy_l = foggy_l.reshape(n, c, s, 128)

    target_block_bytes, vmem_limit = _vmem_budget()
    itemsize = jnp.dtype(clear_l.dtype).itemsize
    ts, needs_mask = _pick_tile_sublanes(c, s, itemsize, target_block_bytes)
    nt = pl.cdiv(s, ts)

    # Small-batch split: give both v7x TensorCores work by splitting the
    # spatial tiles across a leading parallel axis (no-op on v5e/v6e).
    split = 2 if (n == 1 and nt >= 2 and nt % 2 == 0) else 1
    ntps = nt // split

    kernel = functools.partial(
        _midc_kernel, c=c, ts=ts, s=s, ntps=ntps, needs_mask=needs_mask)

    grid_spec = pltpu.PrefetchScalarGridSpec(
        num_scalar_prefetch=0,
        grid=(split, n, ntps),
        in_specs=[
            pl.BlockSpec((None, c, ts, 128),
                         lambda p, b, t: (b, 0, p * ntps + t, 0)),
            pl.BlockSpec((None, c, ts, 128),
                         lambda p, b, t: (b, 0, p * ntps + t, 0)),
        ],
        out_specs=pl.BlockSpec((None, None, 2, 8, 128),
                               lambda p, b, t: (p, b, 0, 0, 0)),
    )

    partials = pl.pallas_call(
        kernel,
        out_shape=jax.ShapeDtypeStruct((split, n, 2, 8, 128), jnp.float32),
        grid_spec=grid_spec,
        compiler_params=pltpu.CompilerParams(
            # split/batch axes parallel (megacore); spatial axis is the
            # accumulation axis of the resident output block.
            dimension_semantics=("parallel", "parallel", "arbitrary"),
            vmem_limit_bytes=vmem_limit,
        ),
    )(clear_l, foggy_l)

    sums = jnp.sum(partials, axis=(0, 1, 3, 4))   # (2,): [sum |.|, sum mask]
    # NaN/Inf when sum(mask) == 0 — intentional, matches the PyTorch reference.
    return sums[0] / sums[1]


def midc_loss_ref(clear, foggy):
    """Pure-JAX reference with identical semantics to the PyTorch module."""
    clear_dc = jnp.min(clear, axis=1, keepdims=True)
    foggy_dc = jnp.min(foggy, axis=1, keepdims=True)
    m = (clear_dc > foggy_dc).astype(jnp.float32)
    dc_c = m * clear_dc
    dc_f = m * foggy_dc
    return jnp.sum(jnp.abs(dc_f - dc_c)) / jnp.sum(m)


if __name__ == "__main__":
    key = jax.random.PRNGKey(0)
    k1, k2 = jax.random.split(key)

    N, C, H, W = 2, 4, 16, 16
    clear = jax.random.uniform(k1, (N, C, H, W), dtype=jnp.float32)
    foggy = jax.random.uniform(k2, (N, C, H, W), dtype=jnp.float32)

    loss = jax.block_until_ready(midc_loss(clear, foggy))
    ref = jax.block_until_ready(midc_loss_ref(clear, foggy))

    assert jnp.allclose(loss, ref, rtol=1e-5, atol=1e-6), (loss, ref)
    print("KERNEL_OK")
</pallas_src>

<mosaic_0001>
module attributes {stable_mosaic.version = 11 : i64} {
  func.func @_midc_kernel(%arg0: i32, %arg1: i32, %arg2: i32, %arg3: memref<1x4x2x128xf32, #tpu.memory_space<vmem>>, %arg4: memref<1x4x2x128xf32, #tpu.memory_space<vmem>>, %arg5: memref<1x1x2x8x128xf32, #tpu.memory_space<vmem>>) attributes {dimension_semantics = [#tpu.dimension_semantics<parallel>, #tpu.dimension_semantics<parallel>, #tpu.dimension_semantics<arbitrary>], iteration_bounds = array<i64: 1, 2, 1>, scalar_prefetch = 0 : i64, scratch_operands = 0 : i64, tpu.core_type = #tpu.core_type<tc>, window_params = [{transform_indices = @transform_0, window_bounds = array<i64: 1, 4, 2, 128>}, {transform_indices = @transform_1, window_bounds = array<i64: 1, 4, 2, 128>}, {transform_indices = @transform_2, window_bounds = array<i64: 1, 1, 2, 8, 128>}]} {
    %c0_i32 = arith.constant 0 : i32
    %0 = arith.cmpi eq, %arg2, %c0_i32 : i32
    %1 = arith.extui %0 : i1 to i32
    %c0_i32_0 = arith.constant 0 : i32
    %2 = arith.cmpi ne, %1, %c0_i32_0 : i32
    scf.if %2 {
      %cst_52 = arith.constant 0.000000e+00 : f32
      %48 = vector.broadcast %cst_52 : f32 to vector<2x8x128xf32>
      %c0_53 = arith.constant 0 : index
      %c0_54 = arith.constant 0 : index
      %c0_55 = arith.constant 0 : index
      %c0_56 = arith.constant 0 : index
      %c0_57 = arith.constant 0 : index
      %49 = vector.load %arg5[%c0_53, %c0_54, %c0_55, %c0_56, %c0_57] : memref<1x1x2x8x128xf32, #tpu.memory_space<vmem>>, vector<1x1x2x8x128xf32>
      %50 = vector.shape_cast %49 : vector<1x1x2x8x128xf32> to vector<2x8x128xf32>
      %51 = vector.shape_cast %48 : vector<2x8x128xf32> to vector<1x1x2x8x128xf32>
      tpu.vector_store %arg5[%c0_53, %c0_54, %c0_55, %c0_56, %c0_57], %51 {strides = array<i32>} : memref<1x1x2x8x128xf32, #tpu.memory_space<vmem>>, vector<1x1x2x8x128xf32>,
    } else {
    }
    %c0 = arith.constant 0 : index
    %c0_1 = arith.constant 0 : index
    %c0_2 = arith.constant 0 : index
    %c0_3 = arith.constant 0 : index
    %3 = vector.load %arg3[%c0, %c0_1, %c0_2, %c0_3] : memref<1x4x2x128xf32, #tpu.memory_space<vmem>>, vector<1x1x2x128xf32>
    %4 = vector.shape_cast %3 : vector<1x1x2x128xf32> to vector<2x128xf32>
    %c0_4 = arith.constant 0 : index
    %c0_5 = arith.constant 0 : index
    %c0_6 = arith.constant 0 : index
    %c0_7 = arith.constant 0 : index
    %5 = vector.load %arg4[%c0_4, %c0_5, %c0_6, %c0_7] : memref<1x4x2x128xf32, #tpu.memory_space<vmem>>, vector<1x1x2x128xf32>
    %6 = vector.shape_cast %5 : vector<1x1x2x128xf32> to vector<2x128xf32>
    %c0_8 = arith.constant 0 : index
    %c1 = arith.constant 1 : index
    %c0_9 = arith.constant 0 : index
    %c0_10 = arith.constant 0 : index
    %7 = vector.load %arg3[%c0_8, %c1, %c0_9, %c0_10] : memref<1x4x2x128xf32, #tpu.memory_space<vmem>>, vector<1x1x2x128xf32>
    %8 = vector.shape_cast %7 : vector<1x1x2x128xf32> to vector<2x128xf32>
    %9 = arith.minimumf %4, %8 : vector<2x128xf32>
    %c0_11 = arith.constant 0 : index
    %c1_12 = arith.constant 1 : index
    %c0_13 = arith.constant 0 : index
    %c0_14 = arith.constant 0 : index
    %10 = vector.load %arg4[%c0_11, %c1_12, %c0_13, %c0_14] : memref<1x4x2x128xf32, #tpu.memory_space<vmem>>, vector<1x1x2x128xf32>
    %11 = vector.shape_cast %10 : vector<1x1x2x128xf32> to vector<2x128xf32>
    %12 = arith.minimumf %6, %11 : vector<2x128xf32>
    %c0_15 = arith.constant 0 : index
    %c2 = arith.constant 2 : index
    %c0_16 = arith.constant 0 : index
    %c0_17 = arith.constant 0 : index
    %13 = vector.load %arg3[%c0_15, %c2, %c0_16, %c0_17] : memref<1x4x2x128xf32, #tpu.memory_space<vmem>>, vector<1x1x2x128xf32>
    %14 = vector.shape_cast %13 : vector<1x1x2x128xf32> to vector<2x128xf32>
    %15 = arith.minimumf %9, %14 : vector<2x128xf32>
    %c0_18 = arith.constant 0 : index
    %c2_19 = arith.constant 2 : index
    %c0_20 = arith.constant 0 : index
    %c0_21 = arith.constant 0 : index
    %16 = vector.load %arg4[%c0_18, %c2_19, %c0_20, %c0_21] : memref<1x4x2x128xf32, #tpu.memory_space<vmem>>, vector<1x1x2x128xf32>
    %17 = vector.shape_cast %16 : vector<1x1x2x128xf32> to vector<2x128xf32>
    %18 = arith.minimumf %12, %17 : vector<2x128xf32>
    %c0_22 = arith.constant 0 : index
    %c3 = arith.constant 3 : index
    %c0_23 = arith.constant 0 : index
    %c0_24 = arith.constant 0 : index
    %19 = vector.load %arg3[%c0_22, %c3, %c0_23, %c0_24] : memref<1x4x2x128xf32, #tpu.memory_space<vmem>>, vector<1x1x2x128xf32>
    %20 = vector.shape_cast %19 : vector<1x1x2x128xf32> to vector<2x128xf32>
    %21 = arith.minimumf %15, %20 : vector<2x128xf32>
    %c0_25 = arith.constant 0 : index
    %c3_26 = arith.constant 3 : index
    %c0_27 = arith.constant 0 : index
    %c0_28 = arith.constant 0 : index
    %22 = vector.load %arg4[%c0_25, %c3_26, %c0_27, %c0_28] : memref<1x4x2x128xf32, #tpu.memory_space<vmem>>, vector<1x1x2x128xf32>
    %23 = vector.shape_cast %22 : vector<1x1x2x128xf32> to vector<2x128xf32>
    %24 = arith.minimumf %18, %23 : vector<2x128xf32>
    %25 = arith.subf %21, %24 : vector<2x128xf32>
    %cst = arith.constant 0.000000e+00 : f32
    %26 = vector.broadcast %cst : f32 to vector<2x128xf32>
    %27 = arith.maximumf %25, %26 : vector<2x128xf32>
    %cst_29 = arith.constant 0.000000e+00 : f32
    %28 = vector.broadcast %cst_29 : f32 to vector<2x128xf32>
    %29 = arith.cmpf ogt, %25, %28 : vector<2x128xf32>
    %30 = arith.extui %29 : vector<2x128xi1> to vector<2x128xi32>
    %31 = arith.sitofp %30 : vector<2x128xi32> to vector<2x128xf32>
    %c0_30 = arith.constant 0 : index
    %c0_31 = arith.constant 0 : index
    %c0_32 = arith.constant 0 : index
    %c0_33 = arith.constant 0 : index
    %c0_34 = arith.constant 0 : index
    %32 = vector.load %arg5[%c0_30, %c0_31, %c0_32, %c0_33, %c0_34] : memref<1x1x2x8x128xf32, #tpu.memory_space<vmem>>, vector<1x1x1x1x128xf32>
    %33 = vector.shape_cast %32 : vector<1x1x1x1x128xf32> to vector<1x128xf32>
    %cst_35 = arith.constant dense<0.000000e+00> : vector<128xf32>
    %34 = vector.multi_reduction <add>, %27, %cst_35 [0] : vector<2x128xf32> to vector<128xf32>
    %35 = vector.shape_cast %34 : vector<128xf32> to vector<1x128xf32>
    %36 = arith.addf %33, %35 : vector<1x128xf32>
    %c0_36 = arith.constant 0 : index
    %c0_37 = arith.constant 0 : index
    %c0_38 = arith.constant 0 : index
    %c0_39 = arith.constant 0 : index
    %c0_40 = arith.constant 0 : index
    %37 = vector.load %arg5[%c0_36, %c0_37, %c0_38, %c0_39, %c0_40] : memref<1x1x2x8x128xf32, #tpu.memory_space<vmem>>, vector<1x1x1x1x128xf32>
    %38 = vector.shape_cast %37 : vector<1x1x1x1x128xf32> to vector<1x128xf32>
    %39 = vector.shape_cast %36 : vector<1x128xf32> to vector<1x1x1x1x128xf32>
    tpu.vector_store %arg5[%c0_36, %c0_37, %c0_38, %c0_39, %c0_40], %39 {strides = array<i32>} : memref<1x1x2x8x128xf32, #tpu.memory_space<vmem>>, vector<1x1x1x1x128xf32>,
    %c0_41 = arith.constant 0 : index
    %c0_42 = arith.constant 0 : index
    %c1_43 = arith.constant 1 : index
    %c0_44 = arith.constant 0 : index
    %c0_45 = arith.constant 0 : index
    %40 = vector.load %arg5[%c0_41, %c0_42, %c1_43, %c0_44, %c0_45] : memref<1x1x2x8x128xf32, #tpu.memory_space<vmem>>, vector<1x1x1x1x128xf32>
    %41 = vector.shape_cast %40 : vector<1x1x1x1x128xf32> to vector<1x128xf32>
    %cst_46 = arith.constant dense<0.000000e+00> : vector<128xf32>
    %42 = vector.multi_reduction <add>, %31, %cst_46 [0] : vector<2x128xf32> to vector<128xf32>
    %43 = vector.shape_cast %42 : vector<128xf32> to vector<1x128xf32>
    %44 = arith.addf %41, %43 : vector<1x128xf32>
    %c0_47 = arith.constant 0 : index
    %c0_48 = arith.constant 0 : index
    %c1_49 = arith.constant 1 : index
    %c0_50 = arith.constant 0 : index
    %c0_51 = arith.constant 0 : index
    %45 = vector.load %arg5[%c0_47, %c0_48, %c1_49, %c0_50, %c0_51] : memref<1x1x2x8x128xf32, #tpu.memory_space<vmem>>, vector<1x1x1x1x128xf32>
    %46 = vector.shape_cast %45 : vector<1x1x1x1x128xf32> to vector<1x128xf32>
    %47 = vector.shape_cast %44 : vector<1x128xf32> to vector<1x1x1x1x128xf32>
    tpu.vector_store %arg5[%c0_47, %c0_48, %c1_49, %c0_50, %c0_51], %47 {strides = array<i32>} : memref<1x1x2x8x128xf32, #tpu.memory_space<vmem>>, vector<1x1x1x1x128xf32>,
    return
  }
  func.func @transform_0(%arg0: i32, %arg1: i32, %arg2: i32) -> (i32, i32, i32, i32) {
    %c1_i32 = arith.constant 1 : i32
    %0 = arith.muli %arg0, %c1_i32 : i32
    %1 = arith.addi %0, %arg2 : i32
    %c0_i32 = arith.constant 0 : i32
    %c0_i32_0 = arith.constant 0 : i32
    %c0_i32_1 = arith.constant 0 : i32
    return %arg1, %c0_i32, %1, %c0_i32_0 : i32, i32, i32, i32
  }
  func.func @transform_1(%arg0: i32, %arg1: i32, %arg2: i32) -> (i32, i32, i32, i32) {
    %c1_i32 = arith.constant 1 : i32
    %0 = arith.muli %arg0, %c1_i32 : i32
    %1 = arith.addi %0, %arg2 : i32
    %c0_i32 = arith.constant 0 : i32
    %c0_i32_0 = arith.constant 0 : i32
    %c0_i32_1 = arith.constant 0 : i32
    return %arg1, %c0_i32, %1, %c0_i32_0 : i32, i32, i32, i32
  }
  func.func @transform_2(%arg0: i32, %arg1: i32, %arg2: i32) -> (i32, i32, i32, i32, i32) {
    %c0_i32 = arith.constant 0 : i32
    %c0_i32_0 = arith.constant 0 : i32
    %c0_i32_1 = arith.constant 0 : i32
    %c0_i32_2 = arith.constant 0 : i32
    return %arg0, %arg1, %c0_i32, %c0_i32_0, %c0_i32_1 : i32, i32, i32, i32, i32
  }
}

</mosaic_0001>

<llo_original>
// kernel: tpu_custom_call.1
$region0: #{tpu_custom_call.1}
  #allocation0 [shape = 'u32[]', space=smem, size = 0x4, offset = 0x4, fixed_abs, tag = 'smem constant byte address 0x4 - core index']
  #allocation1 [shape = 'u32[72,128]{1,0:T(1,128)}', space=vmem, size = 0x9000, scoped, tag = 'internal scratch']
  %s0 = inlined_call_operand.hbm [shape: f32[2,4,2,128], index: 0, kind: input, shape index: {}]
  %s1 = inlined_call_operand.hbm [shape: f32[2,4,2,128], index: 1, kind: input, shape index: {}]
  %s2 = inlined_call_operand.hbm [shape: f32[1,2,2,8,128], index: 2, kind: output, shape index: {}]
  %s3 = sld [smem:[#allocation0]]
  $region53: #{tpu_custom_call.1} parent=0
    _
  %s5 = ssub.s32 1, %s3
  %s6 = scalar_select 0, %s5, %s3
  $region1: #{tpu_custom_call.1} parent=0
    #allocation2 [shape = 'u8[8192]{0}', space=vmem, size = 0x2000, scoped, tag = 'input window, operand 0']
    #allocation3 [shape = 's32[2]{0}', space=sflag, size = 0x8, scoped, tag = 'scoped memory for tpu_custom_call.1']
    #allocation4 [shape = 's32[2]{0}', space=sflag, size = 0x8, scoped, tag = 'scoped memory for tpu_custom_call.1']
    #allocation5 [shape = 'u8[8192]{0}', space=vmem, size = 0x2000, scoped, tag = 'input window, operand 1']
    #allocation6 [shape = 's32[2]{0}', space=sflag, size = 0x8, scoped, tag = 'scoped memory for tpu_custom_call.1']
    #allocation7 [shape = 'u8[16384]{0}', space=vmem, size = 0x4000, scoped, tag = 'output window, operand 0']
    %7 = vsyncpa [#allocation3], 0
    %s8 = scalar_lea.sflag [#allocation3], 1
    %9 = vsyncpa %s8, 0
    %10 = vsyncpa [#allocation6], 0
    %s11 = scalar_lea.sflag [#allocation6], 1
    %12 = vsyncpa %s11, 0
    %13 = vsyncpa [#allocation4], 0
    %s14 = scalar_lea.sflag [#allocation4], 1
    %15 = vsyncpa %s14, 0
    loop: start=0, step=1, limit=4
    $region2: #{tpu_custom_call.1} parent=1 // loop_pre_header
      _
    $region3: #{tpu_custom_call.1} parent=1 // loop_header
      %s17 = sphi 0, %s21
      %p18 = scmp.ge.s32.totalorder %s17, 4
      %s24 = sphi 0, %s43
      %s25 = sphi 0, %s39
      %s26 = sphi 0, %s35
      %s27 = sphi 0, %s24
      %s28 = sphi 0, %s25
      %s29 = sphi 0, %s26
      %s30 = sphi 0, %s27
      %s31 = sphi 0, %s28
      %s32 = sphi 0, %s29
      %s50 = sphi 0, %s52
      %s53 = sphi 0, %s50
      %s54 = sphi 0, %s53
      %s70 = sphi 0, %s54
      %s80 = sphi 0, %s82
      %s83 = sphi 0, %s80
      %s84 = sphi 0, %s83
      %s100 = sphi 0, %s84
      %s108 = sphi 0, %s110
      %s111 = sphi 0, %s108
      %s112 = sphi 0, %s111
      %s128 = sphi 0, %s112
    $region4: #{tpu_custom_call.1} parent=1 // loop_header_branch
      %20 = sbr.rel (%p18) target = $region8
    $region5: #{tpu_custom_call.1} parent=1 // loop_body
      %s22 = ssub.s32 %s17, 1
      %s23 = ssub.s32 %s17, 2
      %s33 = sadd.s32 1, %s26
      %p34 = scmp.ge.s32.totalorder %s33, 1
      %s35 = scalar_select %p34, 0, %s33
      %s36 = sadd.s32 1, %s25
      %s37 = scalar_select %p34, %s36, %s25
      %p38 = scmp.ge.s32.totalorder %s37, 2
      %s39 = scalar_select %p38, 0, %s37
      %s40 = sadd.s32 1, %s24
      %s41 = scalar_select %p38, %s40, %s24
      %p42 = scmp.ge.s32.totalorder %s41, 1
      %s43 = scalar_select %p42, 0, %s41
      %s44 = sadd.s32 %s24, %s26
      %s45 = sadd.s32 %s43, %s35
      %s46 = ssub.s32 %s25, %s39
      %s47 = ssub.s32 %s44, %s45
      %s48 = sor.u32 %s46, %s47
      %p49 = scmp.eq.s32.totalorder %s48, 0
      %s51 = sadd.s32 %s50, 1
      %s52 = scalar_select %p49, %s50, %s51
      %p55 = pneg %p49
      %p56 = scmp.eq.s32.totalorder %s17, 1
      %p57 = por %p55, %p56
      %p58 = scmp.ne.s32.totalorder %s50, %s53
      %p59 = scmp.eq.s32.totalorder %s17, 0
      %p60 = por %p58, %p59
      %p61 = scmp.ne.s32.totalorder %s50, %s53
      %p62 = scmp.eq.s32.totalorder %s22, 1
      %p63 = por %p61, %p62
      %p64 = scmp.ne.s32.totalorder %s53, %s54
      %p65 = scmp.eq.s32.totalorder %s22, 0
      %p66 = por %p64, %p65
      %p67 = scmp.ne.s32.totalorder %s53, %s54
      %p68 = scmp.eq.s32.totalorder %s23, 1
      %p69 = por %p67, %p68
      %p71 = scmp.ne.s32.totalorder %s54, %s70
      %p72 = scmp.eq.s32.totalorder %s23, 0
      %p73 = por %p71, %p72
      %s74 = sadd.s32 %s24, %s26
      %s75 = sadd.s32 %s43, %s35
      %s76 = ssub.s32 %s25, %s39
      %s77 = ssub.s32 %s74, %s75
      %s78 = sor.u32 %s76, %s77
      %p79 = scmp.eq.s32.totalorder %s78, 0
      %s81 = sadd.s32 %s80, 1
      %s82 = scalar_select %p79, %s80, %s81
      %p85 = pneg %p79
      %p86 = scmp.eq.s32.totalorder %s17, 1
      %p87 = por %p85, %p86
      %p88 = scmp.ne.s32.totalorder %s80, %s83
      %p89 = scmp.eq.s32.totalorder %s17, 0
      %p90 = por %p88, %p89
      %p91 = scmp.ne.s32.totalorder %s80, %s83
      %p92 = scmp.eq.s32.totalorder %s22, 1
      %p93 = por %p91, %p92
      %p94 = scmp.ne.s32.totalorder %s83, %s84
      %p95 = scmp.eq.s32.totalorder %s22, 0
      %p96 = por %p94, %p95
      %p97 = scmp.ne.s32.totalorder %s83, %s84
      %p98 = scmp.eq.s32.totalorder %s23, 1
      %p99 = por %p97, %p98
      %p101 = scmp.ne.s32.totalorder %s84, %s100
      %p102 = scmp.eq.s32.totalorder %s23, 0
      %p103 = por %p101, %p102
      %s104 = ssub.s32 %s24, %s43
      %s105 = ssub.s32 %s25, %s39
      %s106 = sor.u32 %s104, %s105
      %p107 = scmp.eq.s32.totalorder %s106, 0
      %s109 = sadd.s32 %s108, 1
      %s110 = scalar_select %p107, %s108, %s109
      %p113 = pneg %p107
      %p114 = scmp.eq.s32.totalorder %s17, 1
      %p115 = por %p113, %p114
      %p116 = scmp.ne.s32.totalorder %s108, %s111
      %p117 = scmp.eq.s32.totalorder %s17, 0
      %p118 = por %p116, %p117
      %p119 = scmp.ne.s32.totalorder %s108, %s111
      %p120 = scmp.eq.s32.totalorder %s22, 1
      %p121 = por %p119, %p120
      %p122 = scmp.ne.s32.totalorder %s111, %s112
      %p123 = scmp.eq.s32.totalorder %s22, 0
      %p124 = por %p122, %p123
      %p125 = scmp.ne.s32.totalorder %s111, %s112
      %p126 = scmp.eq.s32.totalorder %s23, 1
      %p127 = por %p125, %p126
      %p129 = scmp.ne.s32.totalorder %s112, %s128
      %p130 = scmp.eq.s32.totalorder %s23, 0
      %p131 = por %p129, %p130
      %p132 = scmp.le.s32.totalorder 1, %s17
      %p133 = scmp.lt.s32.totalorder %s17, 3
      %p134 = pnand %p132, %p133
      %p135 = pneg %p134
      // Predicated region
      $region9: #{tpu_custom_call.1} parent=5 // pred_check
        _
      $region10: #{tpu_custom_call.1} parent=5 // pred_check_branch
        %137 = sbr.rel (%p134) target = $region12
      $region11: #{tpu_custom_call.1} parent=5 // pred_region
        %s138 = ssub.s32 %s17, 1
      $region12: #{tpu_custom_call.1} parent=5 // pred_fallthru
        _
      %p139 = scmp.lt.s32.totalorder %s17, 2
      // Predicated region
      $region13: #{tpu_custom_call.1} parent=5 // pred_check
        %p140 = pneg %p139
      $region14: #{tpu_custom_call.1} parent=5 // pred_check_branch
        %142 = sbr.rel (%p140) target = $region16
      $region15: #{tpu_custom_call.1} parent=5 // pred_region
        // Predicated region
        $region17: #{tpu_custom_call.1} parent=15 // pred_check
          %p143 = pneg %p60
        $region18: #{tpu_custom_call.1} parent=15 // pred_check_branch
          %145 = sbr.rel (%p143) target = $region20
        $region19: #{tpu_custom_call.1} parent=15 // pred_region
          %s146 = sand.u32 %s50, 1
          %s147 = scalar_lea.sflag [#allocation3], %s146
          %s148 = sand.u32 %s50, 1
          %s149 = smul.addr %s148, 8
          %s150 = scalar_lea.vmem [#allocation2], %s149
          %s151 = sadd.s32 %s24, %s26
          %153 = vsyncadd %s147, 0
          %s154 = smul.addr %s25, 4
          %s155 = sadd.s32 %s151, %s154
          %s156 = smul.addr %s155, 2
          %s157 = scalar_lea.hbm %s0, %s156
          %s158 = sshll.u32 %s157, 4
          %s159 = int_to_ptr.hbm [resolvable:$true] %s158
          %s160 = sshll.u32 %s150, 4
          %s161 = int_to_ptr.vmem [resolvable:$true] %s160
          %166 = dma.hbm_to_vmem [thread:$0]  %s159, 128, %s161, %s147, 32, 32, 2
        $region20: #{tpu_custom_call.1} parent=15 // pred_fallthru
          _
        // Predicated region
        $region21: #{tpu_custom_call.1} parent=15 // pred_check
          %p167 = pneg %p90
        $region22: #{tpu_custom_call.1} parent=15 // pred_check_branch
          %169 = sbr.rel (%p167) target = $region24
        $region23: #{tpu_custom_call.1} parent=15 // pred_region
          %s170 = sand.u32 %s80, 1
          %s171 = scalar_lea.sflag [#allocation6], %s170
          %s172 = sand.u32 %s80, 1
          %s173 = smul.addr %s172, 8
          %s174 = scalar_lea.vmem [#allocation5], %s173
          %s175 = sadd.s32 %s24, %s26
          %177 = vsyncadd %s171, 0
          %s178 = smul.addr %s25, 4
          %s179 = sadd.s32 %s175, %s178
          %s180 = smul.addr %s179, 2
          %s181 = scalar_lea.hbm %s1, %s180
          %s182 = sshll.u32 %s181, 4
          %s183 = int_to_ptr.hbm [resolvable:$true] %s182
          %s184 = sshll.u32 %s174, 4
          %s185 = int_to_ptr.vmem [resolvable:$true] %s184
          %190 = dma.hbm_to_vmem [thread:$0]  %s183, 128, %s185, %s171, 32, 32, 2
        $region24: #{tpu_custom_call.1} parent=15 // pred_fallthru
          _
      $region16: #{tpu_custom_call.1} parent=5 // pred_fallthru
        _
      %p191 = scmp.le.s32.totalorder 1, %s17
      %p192 = scmp.lt.s32.totalorder %s17, 3
      %p193 = pnand %p191, %p192
      %p194 = pneg %p193
      // Predicated region
      $region25: #{tpu_custom_call.1} parent=5 // pred_check
        _
      $region26: #{tpu_custom_call.1} parent=5 // pred_check_branch
        %196 = sbr.rel (%p193) target = $region28
      $region27: #{tpu_custom_call.1} parent=5 // pred_region
        %s197 = ssub.s32 %s17, 1
        %s198 = sand.u32 %s53, 1
        %s199 = scalar_lea.sflag [#allocation3], %s198
        %s200 = sand.u32 %s53, 1
        %s201 = smul.addr %s200, 8
        %s202 = scalar_lea.vmem [#allocation2], %s201
        // Predicated region
        $region29: #{tpu_custom_call.1} parent=27 // pred_check
          %p203 = pneg %p66
        $region30: #{tpu_custom_call.1} parent=27 // pred_check_branch
          %205 = sbr.rel (%p203) target = $region32
        $region31: #{tpu_custom_call.1} parent=27 // pred_region
          %207 = dma.done %s199, 128
        $region32: #{tpu_custom_call.1} parent=27 // pred_fallthru
          _
        %s208 = sand.u32 %s83, 1
        %s209 = scalar_lea.sflag [#allocation6], %s208
        %s210 = sand.u32 %s83, 1
        %s211 = smul.addr %s210, 8
        %s212 = scalar_lea.vmem [#allocation5], %s211
        // Predicated region
        $region33: #{tpu_custom_call.1} parent=27 // pred_check
          %p213 = pneg %p96
        $region34: #{tpu_custom_call.1} parent=27 // pred_check_branch
          %215 = sbr.rel (%p213) target = $region36
        $region35: #{tpu_custom_call.1} parent=27 // pred_region
          %217 = dma.done %s209, 128
        $region36: #{tpu_custom_call.1} parent=27 // pred_fallthru
          _
        %s218 = sand.u32 %s53, 1
        %s219 = scalar_lea.sflag [#allocation3], %s218
        %s220 = sand.u32 %s53, 1
        %s221 = smul.addr %s220, 8
        %s222 = scalar_lea.vmem [#allocation2], %s221
        %p223 = pneg %p66
        %p224 = pneg %p63
        %s225 = sand.u32 %s83, 1
        %s226 = scalar_lea.sflag [#allocation6], %s225
        %s227 = sand.u32 %s83, 1
        %s228 = smul.addr %s227, 8
        %s229 = scalar_lea.vmem [#allocation5], %s228
        %p230 = pneg %p96
        %p231 = pneg %p93
        %p232 = pneg %p124
        %p233 = pneg %p121
        %s234 = sand.u32 %s111, 1
        %s235 = scalar_lea.sflag [#allocation4], %s234
        %s236 = sand.u32 %s111, 1
        %s237 = smul.addr %s236, 16
        %s238 = scalar_lea.vmem [#allocation7], %s237
        %s239 = sadd.s32 %s27, %s29
        %s240 = sadd.s32 %s27, %s29
        %p241 = scmp.eq.s32.totalorder %s29, 0
        // Predicated region
        $region37: #{tpu_custom_call.1} parent=27 // pred_check
          %p242 = pneg %p241
        $region38: #{tpu_custom_call.1} parent=27 // pred_check_branch
          %244 = sbr.rel (%p242) target = $region40
        $region39: #{tpu_custom_call.1} parent=27 // pred_region
          %245 = vst [vmem:[%s238] sm:$0xff] 0.0
          %246 = vst [vmem:[%s238 + $0x8] sm:$0xff] 0.0
        $region40: #{tpu_custom_call.1} parent=27 // pred_fallthru
          _
        %v247 = vld [vmem:[%s202] sm:$0x3]
        %v248 = vld [vmem:[%s212] sm:$0x3]
        %s249 = scalar_lea.vmem %s202, 2 [#allocation2]
        %v250 = vld [vmem:[%s249] sm:$0x3]
        %v251 = vmin.f32 %v247, %v250
        %s252 = scalar_lea.vmem %s212, 2 [#allocation5]
        %v253 = vld [vmem:[%s252] sm:$0x3]
        %v254 = vmin.f32 %v248, %v253
        %s255 = scalar_lea.vmem %s202, 4 [#allocation2]
        %v256 = vld [vmem:[%s255] sm:$0x3]
        %v257 = vmin.f32 %v251, %v256
        %s258 = scalar_lea.vmem %s212, 4 [#allocation5]
        %v259 = vld [vmem:[%s258] sm:$0x3]
        %v260 = vmin.f32 %v254, %v259
        %s261 = scalar_lea.vmem %s202, 6 [#allocation2]
        %v262 = vld [vmem:[%s261] sm:$0x3]
        %v263 = vmin.f32 %v257, %v262
        %s264 = scalar_lea.vmem %s212, 6 [#allocation5]
        %v265 = vld [vmem:[%s264] sm:$0x3]
        %v266 = vmin.f32 %v260, %v265
        %v267 = vsub.f32 %v263, %v266
        %v268 = vmax.f32 %v267, 0.0
        %vm269 = vcmp.gt.f32.partialorder %v267, 0.0
        %v270 = vsel %vm269, 1, 0
        %v271 = vcvt.s32.f32 %v270
        %v272 = vld [vmem:[%s238] sm:$0x1]
        %vm273 = vcmask 1041408
        %v274 = vsel %vm273, %v268, 0.0
        %v275 = vrot.slane %v274, 4
        %v276 = vadd.f32 %v274, %v275
        %v277 = vrot.slane %v276, 2
        %v278 = vadd.f32 %v276, %v277
        %v279 = vrot.slane %v278, 1
        %v280 = vadd.f32 %v278, %v279
        %v281 = vadd.f32 %v272, %v280
        %282 = vst [vmem:[%s238] sm:$0x1] %v281
        %s283 = scalar_lea.vmem %s238, 8 [#allocation7]
        %v284 = vld [vmem:[%s283] sm:$0x1]
        %v285 = vsel %vm273, %v271, 0.0
        %v286 = vrot.slane %v285, 4
        %v287 = vadd.f32 %v285, %v286
        %v288 = vrot.slane %v287, 2
        %v289 = vadd.f32 %v287, %v288
        %v290 = vrot.slane %v289, 1
        %v291 = vadd.f32 %v289, %v290
        %v292 = vadd.f32 %v284, %v291
        %293 = vst [vmem:[%s283] sm:$0x1] %v292
        %s294 = sand.u32 %s111, 1
        %s295 = scalar_lea.sflag [#allocation4], %s294
        %s296 = sand.u32 %s111, 1
        %s297 = smul.addr %s296, 16
        %s298 = scalar_lea.vmem [#allocation7], %s297
        // Predicated region
        $region41: #{tpu_custom_call.1} parent=27 // pred_check
          %p299 = pneg %p121
        $region42: #{tpu_custom_call.1} parent=27 // pred_check_branch
          %301 = sbr.rel (%p299) target = $region44
        $region43: #{tpu_custom_call.1} parent=27 // pred_region
          %303 = vsyncadd %s295, 0
          %s304 = smul.addr %s28, 2
          %s305 = smul.addr %s27, 4
          %s306 = sadd.s32 %s304, %s305
          %s307 = smul.addr %s306, 8
          %s308 = scalar_lea.hbm %s2, %s307
          %s309 = sshll.u32 %s298, 4
          %s310 = int_to_ptr.vmem [resolvable:$true] %s309
          %s311 = sshll.u32 %s308, 4
          %s312 = int_to_ptr.hbm [resolvable:$true] %s311
          %317 = dma.vmem_to_hbm [thread:$0]  %s310, 256, %s312, %s295, 128, 128, 8
        $region44: #{tpu_custom_call.1} parent=27 // pred_fallthru
          _
      $region28: #{tpu_custom_call.1} parent=5 // pred_fallthru
        _
      %p318 = scmp.le.s32.totalorder 2, %s17
      // Predicated region
      $region45: #{tpu_custom_call.1} parent=5 // pred_check
        %p319 = pneg %p318
      $region46: #{tpu_custom_call.1} parent=5 // pred_check_branch
        %321 = sbr.rel (%p319) target = $region48
      $region47: #{tpu_custom_call.1} parent=5 // pred_region
        %s322 = ssub.s32 %s17, 2
        // Predicated region
        $region49: #{tpu_custom_call.1} parent=47 // pred_check
          %p323 = pneg %p127
        $region50: #{tpu_custom_call.1} parent=47 // pred_check_branch
          %325 = sbr.rel (%p323) target = $region52
        $region51: #{tpu_custom_call.1} parent=47 // pred_region
          %s326 = sand.u32 %s112, 1
          %s327 = scalar_lea.sflag [#allocation4], %s326
          %s328 = sand.u32 %s112, 1
          %s329 = smul.addr %s328, 16
          %s330 = scalar_lea.vmem [#allocation7], %s329
          %332 = dma.done %s327, 256
        $region52: #{tpu_custom_call.1} parent=47 // pred_fallthru
          _
      $region48: #{tpu_custom_call.1} parent=5 // pred_fallthru
        _
    $region6: #{tpu_custom_call.1} parent=1 // loop_footer
      %s21 = sadd.s32 1, %s17
    $region7: #{tpu_custom_call.1} parent=1 // loop_footer_branch
      %16 = sbr.rel target = $region3
    $region8: #{tpu_custom_call.1} parent=1 // loop_exit
      _
    %333 = vsyncpa [#allocation3], 1
    %s334 = scalar_lea.sflag [#allocation3], 1
    %335 = vsyncpa %s334, 1
    %336 = vsyncpa [#allocation6], 1
    %s337 = scalar_lea.sflag [#allocation6], 1
    %338 = vsyncpa %s337, 1
    %339 = vsyncpa [#allocation4], 1
    %s340 = scalar_lea.sflag [#allocation4], 1
    %341 = vsyncpa %s340, 1

</llo_original>
